<compile_context>
chip_gen: v5e
topology: v5e:2x2
jax: 0.10.0
libtpu: 0.0.40
codegen_flags: <defaults>
</compile_context>

<pallas_src>
import jax
import jax.numpy as jnp
from jax.experimental import pallas as pl
from jax.experimental.pallas import tpu as pltpu


def _rope_kernel(cos_ref, sin_ref, xq_ref, xk_ref, oq_ref, ok_ref):
    """One grid step processes a (TR, TC) tile of the [B*H, S*D] view.

    cos_ref/sin_ref: (1, TC) f32 tables, interleave-expanded; the pair sign is
    already folded into sin (sin[2j] = -sin, sin[2j+1] = +sin), so
        out = x * cos + swap_pairs(x) * sin
    where swap_pairs(x)[2j] = x[2j+1], swap_pairs(x)[2j+1] = x[2j], built from
    two cheap XLU lane rotations + a parity select.
    """
    cos = cos_ref[...]                               # (1, TC)
    sin = sin_ref[...]                               # (1, TC), sign-folded
    blk = xq_ref.shape                               # (TR, TC)
    last = len(blk) - 1
    n = blk[last]
    # Parity of the local lane == parity of d (TC and D are both even).
    lane = jax.lax.broadcasted_iota(jnp.int32, blk, dimension=last)
    is_even = (lane & 1) == 0

    def rotate(x_ref, o_ref):
        x = x_ref[...].astype(jnp.float32)           # matches xq.float()
        x_next = pltpu.roll(x, shift=n - 1, axis=last)   # x_next[l] = x[l+1]
        x_prev = pltpu.roll(x, shift=1, axis=last)       # x_prev[l] = x[l-1]
        rot = jnp.where(is_even, x_next, x_prev)         # swap adjacent pairs
        o_ref[...] = (x * cos + rot * sin).astype(o_ref.dtype)  # .type_as(x)

    rotate(xq_ref, oq_ref)
    rotate(xk_ref, ok_ref)


def _pick_tile(total: int, align: int, limit: int) -> int:
    """Largest multiple of `align` that divides `total` and is <= limit.
    Falls back to the full extent (always legal per the (8,128) rule)."""
    best = None
    cand = align
    top = min(total, limit)
    while cand <= top:
        if total % cand == 0:
            best = cand
        cand += align
    return best if best is not None else total


class RotaryEmbedding:
    """JAX/Pallas port of the PyTorch RotaryEmbedding module."""

    def __init__(self, dim: int, max_seq_len: int, theta: float = 10000.0):
        assert dim % 2 == 0, "RoPE head_dim must be even"
        # Deterministic buffer construction, mirrors the torch __init__:
        #   freqs_cis = polar(1, outer(t, 1/theta^(2i/dim)))
        freqs = 1.0 / (theta ** (jnp.arange(0, dim, 2, dtype=jnp.float32) / dim))
        t = jnp.arange(max_seq_len, dtype=jnp.float32)
        angles = jnp.outer(t, freqs)                     # (max_seq_len, dim//2)
        c = jnp.cos(angles)
        s = jnp.sin(angles)
        # Interleave-expand to full dim; fold the pair sign into sin so the
        # kernel needs no negate:
        #   cos_tab[s, 2j] = cos_tab[s, 2j+1] = cos
        #   sin_tab[s, 2j] = -sin ; sin_tab[s, 2j+1] = +sin
        self.cos = jnp.stack([c, c], axis=-1).reshape(max_seq_len, dim)
        self.sin = jnp.stack([-s, s], axis=-1).reshape(max_seq_len, dim)
        # Tables kept in f32 to match torch's complex64 freqs_cis exactly.
        self.dim = dim
        self.max_seq_len = max_seq_len
        print(f"[LOG]: Initialized RotaryEmbedding with dim={dim}, "
              f"max_seq_len={max_seq_len}")

    def __call__(self, xq: jnp.ndarray, xk: jnp.ndarray, seq_len: int):
        B, H, S, D = xq.shape
        assert xk.shape == (B, H, S, D)
        assert S == seq_len and D == self.dim and seq_len <= self.max_seq_len

        R = B * H            # sublane (row) extent: one row per (b, h)
        C = S * D            # lane extent: contiguous reshape, no transpose
        cos = self.cos[:S].reshape(1, C)
        sin = self.sin[:S].reshape(1, C)
        xq_f = xq.reshape(R, C)
        xk_f = xk.reshape(R, C)

        # Lane tile: multiple of 128 (lane-dense, unmasked stores), bounded.
        TC = _pick_tile(C, 128, 32768)
        # Row tile: multiple of 8, targeting ~1 MiB f32 per array per block
        # so 2-deep buffers of {xq, xk, oq, ok} + tables + temps stay well
        # under the scoped VMEM limit on v5e/v6e/v7x.
        TR = _pick_tile(R, 8, max(8, 262144 // TC))

        n_r = R // TR
        n_c = C // TC
        # Row tiles innermost: the (1, TC) cos/sin blocks keep the same block
        # index across the inner loop, so they are not re-fetched per step.
        grid = (n_c, n_r)

        tbl_spec = pl.BlockSpec((1, TC), lambda j, i: (0, j))
        x_spec = pl.BlockSpec((TR, TC), lambda j, i: (i, j))

        oq, ok = pl.pallas_call(
            _rope_kernel,
            out_shape=(
                jax.ShapeDtypeStruct((R, C), xq.dtype),
                jax.ShapeDtypeStruct((R, C), xk.dtype),
            ),
            grid_spec=pltpu.PrefetchScalarGridSpec(
                num_scalar_prefetch=0,
                grid=grid,
                in_specs=[tbl_spec, tbl_spec, x_spec, x_spec],
                out_specs=[x_spec, x_spec],
            ),
            compiler_params=pltpu.CompilerParams(
                dimension_semantics=("parallel", "parallel"),
                vmem_limit_bytes=32 * 1024 * 1024,
            ),
        )(cos, sin, xq_f, xk_f)

        return oq.reshape(B, H, S, D), ok.reshape(B, H, S, D)


def _rope_reference(xq, xk, seq_len, dim, theta=10000.0):
    """Pure-JAX reference matching the PyTorch complex-number formulation."""
    freqs = 1.0 / (theta ** (jnp.arange(0, dim, 2, dtype=jnp.float32) / dim))
    t = jnp.arange(seq_len, dtype=jnp.float32)
    angles = jnp.outer(t, freqs)
    freqs_cis = jnp.cos(angles) + 1j * jnp.sin(angles)   # torch.polar(1, angles)

    def apply(x):
        xr = x.astype(jnp.float32).reshape(*x.shape[:-1], -1, 2)
        xc = xr[..., 0] + 1j * xr[..., 1]
        out_c = xc * freqs_cis[None, None]
        out = jnp.stack([jnp.real(out_c), jnp.imag(out_c)], axis=-1)
        return out.reshape(x.shape).astype(x.dtype)

    return apply(xq), apply(xk)


if __name__ == "__main__":
    B, H, S, D = 2, 4, 8, 32
    MAX_SEQ_LEN = 16

    key = jax.random.PRNGKey(0)
    kq, kk = jax.random.split(key)
    xq = jax.random.normal(kq, (B, H, S, D), dtype=jnp.float32)
    xk = jax.random.normal(kk, (B, H, S, D), dtype=jnp.float32)

    rope = RotaryEmbedding(dim=D, max_seq_len=MAX_SEQ_LEN)
    oq, ok = rope(xq, xk, seq_len=S)
    jax.block_until_ready((oq, ok))

    rq, rk = _rope_reference(xq, xk, S, D)
    assert oq.shape == xq.shape and oq.dtype == xq.dtype
    assert ok.shape == xk.shape and ok.dtype == xk.dtype
    assert jnp.allclose(oq, rq, atol=1e-5, rtol=1e-5), "xq rotary mismatch"
    assert jnp.allclose(ok, rk, atol=1e-5, rtol=1e-5), "xk rotary mismatch"

    print("KERNEL_OK")
</pallas_src>

<mosaic_0001>
module attributes {stable_mosaic.version = 11 : i64} {
  func.func @_rope_kernel(%arg0: i32, %arg1: i32, %arg2: memref<1x256xf32, #tpu.memory_space<vmem>>, %arg3: memref<1x256xf32, #tpu.memory_space<vmem>>, %arg4: memref<8x256xf32, #tpu.memory_space<vmem>>, %arg5: memref<8x256xf32, #tpu.memory_space<vmem>>, %arg6: memref<8x256xf32, #tpu.memory_space<vmem>>, %arg7: memref<8x256xf32, #tpu.memory_space<vmem>>) attributes {dimension_semantics = [#tpu.dimension_semantics<parallel>, #tpu.dimension_semantics<parallel>], iteration_bounds = array<i64: 1, 1>, scalar_prefetch = 0 : i64, scratch_operands = 0 : i64, tpu.core_type = #tpu.core_type<tc>, window_params = [{transform_indices = @transform_0, window_bounds = array<i64: 1, 256>}, {transform_indices = @transform_1, window_bounds = array<i64: 1, 256>}, {transform_indices = @transform_2, window_bounds = array<i64: 8, 256>}, {transform_indices = @transform_3, window_bounds = array<i64: 8, 256>}, {transform_indices = @transform_4, window_bounds = array<i64: 8, 256>}, {transform_indices = @transform_5, window_bounds = array<i64: 8, 256>}]} {
    %c0 = arith.constant 0 : index
    %c0_0 = arith.constant 0 : index
    %0 = vector.load %arg2[%c0, %c0_0] : memref<1x256xf32, #tpu.memory_space<vmem>>, vector<1x256xf32>
    %c0_1 = arith.constant 0 : index
    %c0_2 = arith.constant 0 : index
    %1 = vector.load %arg3[%c0_1, %c0_2] : memref<1x256xf32, #tpu.memory_space<vmem>>, vector<1x256xf32>
    %2 = tpu.iota {dimensions = array<i32: 1>} : vector<8x256xi32>
    %c1_i32 = arith.constant 1 : i32
    %3 = vector.broadcast %c1_i32 : i32 to vector<8x256xi32>
    %4 = arith.andi %2, %3 : vector<8x256xi32>
    %c0_i32 = arith.constant 0 : i32
    %5 = vector.broadcast %c0_i32 : i32 to vector<8x256xi32>
    %6 = arith.cmpi eq, %4, %5 : vector<8x256xi32>
    %c0_3 = arith.constant 0 : index
    %c0_4 = arith.constant 0 : index
    %7 = vector.load %arg4[%c0_3, %c0_4] : memref<8x256xf32, #tpu.memory_space<vmem>>, vector<8x256xf32>
    %c255_i32 = arith.constant 255 : i32
    %8 = tpu.dynamic_rotate %7 by %c255_i32 dim 1 : vector<8x256xf32>, i32 -> vector<8x256xf32>
    %c1_i32_5 = arith.constant 1 : i32
    %9 = tpu.dynamic_rotate %7 by %c1_i32_5 dim 1 : vector<8x256xf32>, i32 -> vector<8x256xf32>
    %10 = arith.select %6, %8, %9 : vector<8x256xi1>, vector<8x256xf32>
    %11 = vector.broadcast %0 : vector<1x256xf32> to vector<8x256xf32>
    %12 = arith.mulf %7, %11 : vector<8x256xf32>
    %13 = vector.broadcast %1 : vector<1x256xf32> to vector<8x256xf32>
    %14 = arith.mulf %10, %13 : vector<8x256xf32>
    %15 = arith.addf %12, %14 : vector<8x256xf32>
    %c0_6 = arith.constant 0 : index
    %c0_7 = arith.constant 0 : index
    %16 = vector.load %arg6[%c0_6, %c0_7] : memref<8x256xf32, #tpu.memory_space<vmem>>, vector<8x256xf32>
    tpu.vector_store %arg6[%c0_6, %c0_7], %15 {strides = array<i32>} : memref<8x256xf32, #tpu.memory_space<vmem>>, vector<8x256xf32>,
    %c0_8 = arith.constant 0 : index
    %c0_9 = arith.constant 0 : index
    %17 = vector.load %arg5[%c0_8, %c0_9] : memref<8x256xf32, #tpu.memory_space<vmem>>, vector<8x256xf32>
    %c255_i32_10 = arith.constant 255 : i32
    %18 = tpu.dynamic_rotate %17 by %c255_i32_10 dim 1 : vector<8x256xf32>, i32 -> vector<8x256xf32>
    %c1_i32_11 = arith.constant 1 : i32
    %19 = tpu.dynamic_rotate %17 by %c1_i32_11 dim 1 : vector<8x256xf32>, i32 -> vector<8x256xf32>
    %20 = arith.select %6, %18, %19 : vector<8x256xi1>, vector<8x256xf32>
    %21 = vector.broadcast %0 : vector<1x256xf32> to vector<8x256xf32>
    %22 = arith.mulf %17, %21 : vector<8x256xf32>
    %23 = vector.broadcast %1 : vector<1x256xf32> to vector<8x256xf32>
    %24 = arith.mulf %20, %23 : vector<8x256xf32>
    %25 = arith.addf %22, %24 : vector<8x256xf32>
    %c0_12 = arith.constant 0 : index
    %c0_13 = arith.constant 0 : index
    %26 = vector.load %arg7[%c0_12, %c0_13] : memref<8x256xf32, #tpu.memory_space<vmem>>, vector<8x256xf32>
    tpu.vector_store %arg7[%c0_12, %c0_13], %25 {strides = array<i32>} : memref<8x256xf32, #tpu.memory_space<vmem>>, vector<8x256xf32>,
    return
  }
  func.func @transform_0(%arg0: i32, %arg1: i32) -> (i32, i32) {
    %c0_i32 = arith.constant 0 : i32
    %c0_i32_0 = arith.constant 0 : i32
    return %c0_i32, %arg0 : i32, i32
  }
  func.func @transform_1(%arg0: i32, %arg1: i32) -> (i32, i32) {
    %c0_i32 = arith.constant 0 : i32
    %c0_i32_0 = arith.constant 0 : i32
    return %c0_i32, %arg0 : i32, i32
  }
  func.func @transform_2(%arg0: i32, %arg1: i32) -> (i32, i32) {
    %c0_i32 = arith.constant 0 : i32
    return %arg1, %arg0 : i32, i32
  }
  func.func @transform_3(%arg0: i32, %arg1: i32) -> (i32, i32) {
    %c0_i32 = arith.constant 0 : i32
    return %arg1, %arg0 : i32, i32
  }
  func.func @transform_4(%arg0: i32, %arg1: i32) -> (i32, i32) {
    %c0_i32 = arith.constant 0 : i32
    return %arg1, %arg0 : i32, i32
  }
  func.func @transform_5(%arg0: i32, %arg1: i32) -> (i32, i32) {
    %c0_i32 = arith.constant 0 : i32
    return %arg1, %arg0 : i32, i32
  }
}

</mosaic_0001>

<llo_original>
// kernel: tpu_custom_call.1
$region0: #{tpu_custom_call.1}
  #allocation0 [shape = 'u32[]', space=smem, size = 0x4, offset = 0x4, fixed_abs, tag = 'smem constant byte address 0x4 - core index']
  #allocation1 [shape = 'u32[72,128]{1,0:T(1,128)}', space=vmem, size = 0x9000, scoped, tag = 'internal scratch']
  %s0 = inlined_call_operand.hbm [shape: f32[1,256], index: 0, kind: input, shape index: {}]
  %s1 = inlined_call_operand.hbm [shape: f32[1,256], index: 1, kind: input, shape index: {}]
  %s2 = inlined_call_operand.hbm [shape: f32[8,256], index: 2, kind: input, shape index: {}]
  %s3 = inlined_call_operand.hbm [shape: f32[8,256], index: 3, kind: input, shape index: {}]
  %s4 = inlined_call_operand.hbm [shape: f32[8,256], index: 4, kind: output, shape index: {0}]
  %s5 = inlined_call_operand.hbm [shape: f32[8,256], index: 5, kind: output, shape index: {1}]
  %6 = xla_tuple %s4, %s5
  %s7 = sld [smem:[#allocation0]]
  $region50: #{tpu_custom_call.1} parent=0
    _
  %s9 = ssub.s32 1, %s7
  %s10 = scalar_select 0, %s9, %s7
  $region1: #{tpu_custom_call.1} parent=0
    #allocation2 [shape = 'u8[1024]{0}', space=vmem, size = 0x400, scoped, tag = 'input window, operand 0, single buffered']
    #allocation3 [shape = 's32[1]{0}', space=sflag, size = 0x4, scoped, tag = 'scoped memory for tpu_custom_call.1']
    #allocation4 [shape = 's32[1]{0}', space=sflag, size = 0x4, scoped, tag = 'scoped memory for tpu_custom_call.1']
    #allocation5 [shape = 'u8[1024]{0}', space=vmem, size = 0x400, scoped, tag = 'input window, operand 1, single buffered']
    #allocation6 [shape = 's32[1]{0}', space=sflag, size = 0x4, scoped, tag = 'scoped memory for tpu_custom_call.1']
    #allocation7 [shape = 'u8[8192]{0}', space=vmem, size = 0x2000, scoped, tag = 'input window, operand 2, single buffered']
    #allocation8 [shape = 'u8[8192]{0}', space=vmem, size = 0x2000, scoped, tag = 'input window, operand 3, single buffered']
    #allocation9 [shape = 's32[1]{0}', space=sflag, size = 0x4, scoped, tag = 'scoped memory for tpu_custom_call.1']
    #allocation10 [shape = 'u8[8192]{0}', space=vmem, size = 0x2000, scoped, tag = 'output window, operand 0, single buffered']
    #allocation11 [shape = 'u8[8192]{0}', space=vmem, size = 0x2000, scoped, tag = 'output window, operand 1, single buffered']
    #allocation12 [shape = 's32[1]{0}', space=sflag, size = 0x4, scoped, tag = 'scoped memory for tpu_custom_call.1']
    %11 = vsyncpa [#allocation3], 0
    %12 = vsyncpa [#allocation6], 0
    %13 = vsyncpa [#allocation9], 0
    %14 = vsyncpa [#allocation4], 0
    %15 = vsyncpa [#allocation12], 0
    // Predicated region
    $region2: #{tpu_custom_call.1} parent=1 // pred_check
      _
    $region3: #{tpu_custom_call.1} parent=1 // pred_check_branch
      %17 = sbr.rel (0) target = $region5
    $region4: #{tpu_custom_call.1} parent=1 // pred_region
      %19 = vsyncadd [#allocation3], 0
      %s21 = sshll.u32 %s0, 4
      %s22 = int_to_ptr.hbm [resolvable:$true] %s21
      %s23 = sshll.u32 [#allocation2], 4
      %s24 = int_to_ptr.vmem [resolvable:$true] %s23
      %26 = dma.hbm_to_vmem [thread:$0]  %s22, 32, %s24, [#allocation3]
    $region5: #{tpu_custom_call.1} parent=1 // pred_fallthru
      _
    // Predicated region
    $region6: #{tpu_custom_call.1} parent=1 // pred_check
      _
    $region7: #{tpu_custom_call.1} parent=1 // pred_check_branch
      %28 = sbr.rel (0) target = $region9
    $region8: #{tpu_custom_call.1} parent=1 // pred_region
      %30 = vsyncadd [#allocation6], 0
      %s32 = sshll.u32 %s1, 4
      %s33 = int_to_ptr.hbm [resolvable:$true] %s32
      %s34 = sshll.u32 [#allocation5], 4
      %s35 = int_to_ptr.vmem [resolvable:$true] %s34
      %37 = dma.hbm_to_vmem [thread:$0]  %s33, 32, %s35, [#allocation6]
    $region9: #{tpu_custom_call.1} parent=1 // pred_fallthru
      _
    // Predicated region
    $region10: #{tpu_custom_call.1} parent=1 // pred_check
      _
    $region11: #{tpu_custom_call.1} parent=1 // pred_check_branch
      %39 = sbr.rel (0) target = $region13
    $region12: #{tpu_custom_call.1} parent=1 // pred_region
      %41 = vsyncadd [#allocation6], 0
      %s43 = sshll.u32 %s2, 4
      %s44 = int_to_ptr.hbm [resolvable:$true] %s43
      %s45 = sshll.u32 [#allocation7], 4
      %s46 = int_to_ptr.vmem [resolvable:$true] %s45
      %48 = dma.hbm_to_vmem [thread:$0]  %s44, 256, %s46, [#allocation6]
    $region13: #{tpu_custom_call.1} parent=1 // pred_fallthru
      _
    // Predicated region
    $region14: #{tpu_custom_call.1} parent=1 // pred_check
      _
    $region15: #{tpu_custom_call.1} parent=1 // pred_check_branch
      %50 = sbr.rel (0) target = $region17
    $region16: #{tpu_custom_call.1} parent=1 // pred_region
      %52 = vsyncadd [#allocation9], 0
      %s54 = sshll.u32 %s3, 4
      %s55 = int_to_ptr.hbm [resolvable:$true] %s54
      %s56 = sshll.u32 [#allocation8], 4
      %s57 = int_to_ptr.vmem [resolvable:$true] %s56
      %59 = dma.hbm_to_vmem [thread:$0]  %s55, 256, %s57, [#allocation9]
    $region17: #{tpu_custom_call.1} parent=1 // pred_fallthru
      _
    // Predicated region
    $region18: #{tpu_custom_call.1} parent=1 // pred_check
      _
    $region19: #{tpu_custom_call.1} parent=1 // pred_check_branch
      %61 = sbr.rel (0) target = $region21
    $region20: #{tpu_custom_call.1} parent=1 // pred_region
      %63 = dma.done [#allocation3], 32
    $region21: #{tpu_custom_call.1} parent=1 // pred_fallthru
      _
    // Predicated region
    $region22: #{tpu_custom_call.1} parent=1 // pred_check
      _
    $region23: #{tpu_custom_call.1} parent=1 // pred_check_branch
      %65 = sbr.rel (0) target = $region25
    $region24: #{tpu_custom_call.1} parent=1 // pred_region
      %67 = dma.done [#allocation6], 32
    $region25: #{tpu_custom_call.1} parent=1 // pred_fallthru
      _
    // Predicated region
    $region26: #{tpu_custom_call.1} parent=1 // pred_check
      _
    $region27: #{tpu_custom_call.1} parent=1 // pred_check_branch
      %69 = sbr.rel (0) target = $region29
    $region28: #{tpu_custom_call.1} parent=1 // pred_region
      %71 = dma.done [#allocation6], 256
    $region29: #{tpu_custom_call.1} parent=1 // pred_fallthru
      _
    // Predicated region
    $region30: #{tpu_custom_call.1} parent=1 // pred_check
      _
    $region31: #{tpu_custom_call.1} parent=1 // pred_check_branch
      %73 = sbr.rel (0) target = $region33
    $region32: #{tpu_custom_call.1} parent=1 // pred_region
      %75 = dma.done [#allocation9], 256
    $region33: #{tpu_custom_call.1} parent=1 // pred_fallthru
      _
    %v76 = vld [vmem:[#allocation2] sm:$0x3]
    %v77 = vld [vmem:[#allocation5] sm:$0x3]
    %v78 = vlaneseq
    %v79 = vand.u32 %v78, 127
    %v80 = vadd.s32 %v79, 128
    %v81 = vand.u32 %v79, 1
    %v82 = vand.u32 %v80, 1
    %vm83 = vcmp.eq.s32.totalorder %v81, 0
    %vm84 = vcmp.eq.s32.totalorder %v82, 0
    %v85 = vld [vmem:[#allocation7] sm:$0xff]
    %v86 = vld [vmem:[#allocation7 + $0x8] sm:$0xff]
    %87 = vrot.lane.b32.xlu0 %v85, 127
    %v88 = vpop.permute.xlu0 %87
    %89 = vrot.lane.b32.xlu0 %v86, 127
    %v90 = vpop.permute.xlu0 %89
    %vm91 = vcmp.lt.s32.totalorder %v79, 127
    %v92 = vsel %vm91, %v88, %v90
    %v93 = vsel %vm91, %v90, %v88
    %94 = vrot.lane.b32.xlu0 %v85, 1
    %v95 = vpop.permute.xlu0 %94
    %96 = vrot.lane.b32.xlu0 %v86, 1
    %v97 = vpop.permute.xlu0 %96
    %vm98 = vcmp.lt.s32.totalorder %v79, 1
    %v99 = vsel %vm98, %v95, %v97
    %v100 = vsel %vm98, %v97, %v95
    %v101 = vsel %vm83, %v92, %v100
    %v102 = vsel %vm84, %v93, %v99
    %v104 = vperm.slane %v76, 0
    %v105 = vperm.slane %v76, 1
    %v108 = vmul.f32 %v85, %v104
    %v109 = vmul.f32 %v86, %v105
    %v111 = vperm.slane %v77, 0
    %v112 = vperm.slane %v77, 1
    %v115 = vmul.f32 %v101, %v111
    %v116 = vmul.f32 %v102, %v112
    %v117 = vadd.f32 %v108, %v115
    %v118 = vadd.f32 %v109, %v116
    %119 = vst [vmem:[#allocation10] sm:$0xff] %v117
    %120 = vst [vmem:[#allocation10 + $0x8] sm:$0xff] %v118
    %v121 = vld [vmem:[#allocation8] sm:$0xff]
    %v122 = vld [vmem:[#allocation8 + $0x8] sm:$0xff]
    %123 = vrot.lane.b32.xlu0 %v121, 127
    %v124 = vpop.permute.xlu0 %123
    %125 = vrot.lane.b32.xlu0 %v122, 127
    %v126 = vpop.permute.xlu0 %125
    %v127 = vsel %vm91, %v124, %v126
    %v128 = vsel %vm91, %v126, %v124
    %129 = vrot.lane.b32.xlu0 %v121, 1
    %v130 = vpop.permute.xlu0 %129
    %131 = vrot.lane.b32.xlu0 %v122, 1
    %v132 = vpop.permute.xlu0 %131
    %v133 = vsel %vm98, %v130, %v132
    %v134 = vsel %vm98, %v132, %v130
    %v135 = vsel %vm83, %v127, %v134
    %v136 = vsel %vm84, %v128, %v133
    %v137 = vmul.f32 %v121, %v104
    %v138 = vmul.f32 %v122, %v105
    %v139 = vmul.f32 %v135, %v111
    %v140 = vmul.f32 %v136, %v112
    %v141 = vadd.f32 %v137, %v139
    %v142 = vadd.f32 %v138, %v140
    %143 = vst [vmem:[#allocation11] sm:$0xff] %v141
    %144 = vst [vmem:[#allocation11 + $0x8] sm:$0xff] %v142
    // Predicated region
    $region34: #{tpu_custom_call.1} parent=1 // pred_check
      _
    $region35: #{tpu_custom_call.1} parent=1 // pred_check_branch
      %146 = sbr.rel (0) target = $region37
    $region36: #{tpu_custom_call.1} parent=1 // pred_region
      %148 = vsyncadd [#allocation4], 0
      %s150 = sshll.u32 [#allocation10], 4
      %s151 = int_to_ptr.vmem [resolvable:$true] %s150
      %s152 = sshll.u32 %s4, 4
      %s153 = int_to_ptr.hbm [resolvable:$true] %s152
      %155 = dma.vmem_to_hbm [thread:$0]  %s151, 256, %s153, [#allocation4]
    $region37: #{tpu_custom_call.1} parent=1 // pred_fallthru
      _
    // Predicated region
    $region38: #{tpu_custom_call.1} parent=1 // pred_check
      _
    $region39: #{tpu_custom_call.1} parent=1 // pred_check_branch
      %157 = sbr.rel (0) target = $region41
    $region40: #{tpu_custom_call.1} parent=1 // pred_region
      %159 = vsyncadd [#allocation12], 0
      %s161 = sshll.u32 [#allocation11], 4
      %s162 = int_to_ptr.vmem [resolvable:$true] %s161
      %s163 = sshll.u32 %s5, 4
      %s164 = int_to_ptr.hbm [resolvable:$true] %s163
      %166 = dma.vmem_to_hbm [thread:$0]  %s162, 256, %s164, [#allocation12]
    $region41: #{tpu_custom_call.1} parent=1 // pred_fallthru
      _
    // Predicated region
    $region42: #{tpu_custom_call.1} parent=1 // pred_check
      _
    $region43: #{tpu_custom_call.1} parent=1 // pred_check_branch
      %168 = sbr.rel (0) target = $region45
    $region44: #{tpu_custom_call.1} parent=1 // pred_region
      %170 = dma.done [#allocation4], 256
    $region45: #{tpu_custom_call.1} parent=1 // pred_fallthru
      _
    // Predicated region
    $region46: #{tpu_custom_call.1} parent=1 // pred_check
      _
    $region47: #{tpu_custom_call.1} parent=1 // pred_check_branch
      %172 = sbr.rel (0) target = $region49
    $region48: #{tpu_custom_call.1} parent=1 // pred_region
      %174 = dma.done [#allocation12], 256
    $region49: #{tpu_custom_call.1} parent=1 // pred_fallthru
      _
    %175 = vsyncpa [#allocation3], 1
    %176 = vsyncpa [#allocation6], 1
    %177 = vsyncpa [#allocation9], 1
    %178 = vsyncpa [#allocation4], 1
    %179 = vsyncpa [#allocation12], 1

</llo_original>
